<compile_context>
chip_gen: v7x
topology: tpu7x:2x2x1
jax: 0.10.0
libtpu: 0.0.40
codegen_flags: <defaults>
</compile_context>

<pallas_src>
import functools
import math

import jax
import jax.numpy as jnp
from jax import lax
from jax.experimental import pallas as pl
from jax.experimental.pallas import tpu as pltpu

EPS = 1e-12


def _refined_reciprocal(x):
    """EUP approx reciprocal + one Newton step (r <- r * (2 - x*r))."""
    r = pl.reciprocal(x, approx=True)
    return r * (2.0 - x * r)


def _memory_module_kernel(q_ref, mem_ref, memt_ref, z_ref, att_ref, *,
                          shrink_threshold):
    # Upcast inside the kernel only (no wrapper-side astype pass over HBM).
    q = q_ref[...].astype(jnp.float32)

    # F.normalize(p=2, dim=1): q * rsqrt(max(||q||^2, eps^2))  -> EUP rsqrt.
    sumsq = jnp.sum(q * q, axis=1, keepdims=True)
    q_norm = q * lax.rsqrt(jnp.maximum(sumsq, EPS * EPS))

    # Attention logits: (TB, D) @ (D, M) on the MXU, bf16 operands, f32 accumulate.
    # Memory is already L2-normalized and transposed in the wrapper.
    logits = jnp.dot(q_norm.astype(jnp.bfloat16), memt_ref[...],
                     preferred_element_type=jnp.float32)

    # Both operands are unit-norm -> logits in [-1, 1]: no max-subtraction needed.
    e = jnp.exp(logits)
    s = jnp.sum(e, axis=1, keepdims=True)

    if shrink_threshold > 0:
        # Fold softmax 1/s into the final L1 renorm: att_i > t  <=>  e_i > t*s,
        # and the common 1/s factor cancels in the normalization.
        shifted = e - shrink_threshold * s
        denom = jnp.abs(shifted) + EPS
        w = jnp.maximum(shifted, 0.0) * e * _refined_reciprocal(denom)
        # w >= 0 already, so the L1 norm needs no abs pass.
        l1 = jnp.maximum(jnp.sum(w, axis=1, keepdims=True), EPS)
        att = w * _refined_reciprocal(l1)
    else:
        att = e * _refined_reciprocal(s)

    # Memory readout: (TB, M) @ (M, D) on the MXU, bf16 operands, f32 accumulate.
    z_ref[...] = jnp.dot(att.astype(jnp.bfloat16), mem_ref[...],
                         preferred_element_type=jnp.float32).astype(z_ref.dtype)
    att_ref[...] = att.astype(att_ref.dtype)


def _round_up(n, m):
    return ((n + m - 1) // m) * m


def memory_module_forward(query, memory, shrink_threshold, *, block_rows=2048):
    """query: (B, latent_dim); memory: (mem_size, latent_dim). Returns (z_hat, att)."""
    B, D = query.shape
    M, D2 = memory.shape
    assert D == D2, "query / memory latent dims must match"

    # Hoist query-invariant work: L2-normalize memory rows, pre-transpose, and
    # store the MXU operands in bf16 (f32 accumulation happens in-kernel).
    mem_f32 = memory.astype(jnp.float32)
    inv_norm = lax.rsqrt(
        jnp.maximum(jnp.sum(mem_f32 * mem_f32, axis=1, keepdims=True), EPS * EPS))
    memt_norm = (mem_f32 * inv_norm).T.astype(jnp.bfloat16)   # (D, M) logits operand
    mem_bf16 = mem_f32.astype(jnp.bfloat16)                   # (M, D) readout operand

    # Batch tile: multiple of 8 sublanes, capped by the (rounded) batch. Prefer at
    # least 2 grid steps so a parallel batch axis can split across TensorCores.
    tb = min(_round_up(int(block_rows), 8), _round_up(B, 8))
    if _round_up(B, 8) > 8 and pl.cdiv(B, tb) < 2:
        tb = _round_up(pl.cdiv(B, 2), 8)
    grid = (pl.cdiv(B, tb),)   # no wrapper-side padding; Pallas clips the last block

    kernel = functools.partial(_memory_module_kernel,
                               shrink_threshold=float(shrink_threshold))

    z_hat, att = pl.pallas_call(
        kernel,
        out_shape=(jax.ShapeDtypeStruct((B, D), jnp.float32),
                   jax.ShapeDtypeStruct((B, M), jnp.float32)),
        grid=grid,
        in_specs=[
            pl.BlockSpec((tb, D), lambda i: (i, 0)),   # query: streamed over batch
            pl.BlockSpec((M, D), lambda i: (0, 0)),    # memory (bf16): VMEM-resident
            pl.BlockSpec((D, M), lambda i: (0, 0)),    # normalized memory^T (bf16): resident
        ],
        out_specs=(
            pl.BlockSpec((tb, D), lambda i: (i, 0)),   # z_hat
            pl.BlockSpec((tb, M), lambda i: (i, 0)),   # att weights
        ),
        compiler_params=pltpu.CompilerParams(
            dimension_semantics=("parallel",),
            vmem_limit_bytes=32 * 1024 * 1024,
        ),
    )(query, mem_bf16, memt_norm)

    return z_hat, att


# ----------------------------- pure-JAX reference -----------------------------

def memory_module_reference(query, memory, shrink_threshold):
    qn = query / jnp.maximum(jnp.linalg.norm(query, axis=1, keepdims=True), EPS)
    mn = memory / jnp.maximum(jnp.linalg.norm(memory, axis=1, keepdims=True), EPS)
    att = jax.nn.softmax(qn @ mn.T, axis=1)
    if shrink_threshold > 0:
        shifted = att - shrink_threshold
        att = jnp.maximum(shifted, 0.0) * att / (jnp.abs(shifted) + EPS)
        att = att / jnp.maximum(jnp.sum(jnp.abs(att), axis=1, keepdims=True), EPS)
    z_hat = att @ memory
    return z_hat, att


if __name__ == "__main__":
    mem_size, latent_dim = 128, 32      # lane-dense memory axis (multiple of 128)
    batch = 20                          # not a tile multiple -> exercises partial block
    shrink_threshold = 0.0025

    key = jax.random.PRNGKey(0)
    kq, km = jax.random.split(key)
    bound = math.sqrt(6.0 / (mem_size + latent_dim))        # xavier_uniform_
    memory = jax.random.uniform(km, (mem_size, latent_dim), jnp.float32, -bound, bound)
    query = jax.random.normal(kq, (batch, latent_dim), jnp.float32)

    # Default block_rows; the wrapper clamps the tile so this tiny batch still
    # produces a 2-step grid with a clipped partial last block.
    z_hat, att = memory_module_forward(query, memory, shrink_threshold)
    z_hat, att = jax.block_until_ready((z_hat, att))

    z_ref, att_ref = memory_module_reference(query, memory, shrink_threshold)
    assert z_hat.shape == (batch, latent_dim) and att.shape == (batch, mem_size)
    # Tolerance covers bf16 MXU operands + refined EUP reciprocals.
    assert bool(jnp.allclose(att, att_ref, atol=2e-3, rtol=2e-3)), "att mismatch vs reference"
    assert bool(jnp.allclose(z_hat, z_ref, atol=2e-3, rtol=2e-3)), "z_hat mismatch vs reference"

    print("KERNEL_OK")
</pallas_src>

<mosaic_0001>
module attributes {stable_mosaic.version = 11 : i64} {
  func.func @_memory_module_kernel(%arg0: i32, %arg1: memref<16x32xf32, #tpu.memory_space<vmem>>, %arg2: memref<128x32xbf16, #tpu.memory_space<vmem>>, %arg3: memref<32x128xbf16, #tpu.memory_space<vmem>>, %arg4: memref<16x32xf32, #tpu.memory_space<vmem>>, %arg5: memref<16x128xf32, #tpu.memory_space<vmem>>) attributes {dimension_semantics = [#tpu.dimension_semantics<parallel>], iteration_bounds = array<i64: 2>, scalar_prefetch = 0 : i64, scratch_operands = 0 : i64, tpu.core_type = #tpu.core_type<tc>, window_params = [{transform_indices = @transform_0, window_bounds = array<i64: 16, 32>}, {pipeline_mode = #tpu.pipeline_mode<synchronous>, transform_indices = @transform_1, window_bounds = array<i64: 128, 32>}, {pipeline_mode = #tpu.pipeline_mode<synchronous>, transform_indices = @transform_2, window_bounds = array<i64: 32, 128>}, {transform_indices = @transform_3, window_bounds = array<i64: 16, 32>}, {transform_indices = @transform_4, window_bounds = array<i64: 16, 128>}]} {
    %c0 = arith.constant 0 : index
    %c0_0 = arith.constant 0 : index
    %0 = vector.load %arg1[%c0, %c0_0] : memref<16x32xf32, #tpu.memory_space<vmem>>, vector<16x32xf32>
    %1 = arith.mulf %0, %0 : vector<16x32xf32>
    %cst = arith.constant dense<0.000000e+00> : vector<16xf32>
    %2 = vector.multi_reduction <add>, %1, %cst [1] : vector<16x32xf32> to vector<16xf32>
    %3 = vector.shape_cast %2 : vector<16xf32> to vector<16x1xf32>
    %cst_1 = arith.constant 1.000000e-24 : f32
    %4 = vector.broadcast %cst_1 : f32 to vector<16x1xf32>
    %5 = arith.maximumf %3, %4 : vector<16x1xf32>
    %6 = math.rsqrt %5 : vector<16x1xf32>
    %7 = vector.broadcast %6 : vector<16x1xf32> to vector<16x32xf32>
    %8 = arith.mulf %0, %7 : vector<16x32xf32>
    %9 = arith.truncf %8 : vector<16x32xf32> to vector<16x32xbf16>
    %c0_2 = arith.constant 0 : index
    %c0_3 = arith.constant 0 : index
    %10 = vector.load %arg3[%c0_2, %c0_3] : memref<32x128xbf16, #tpu.memory_space<vmem>>, vector<32x128xbf16>
    %cst_4 = arith.constant dense<0.000000e+00> : vector<16x128xf32>
    %11 = tpu.matmul %9, %10, %cst_4 {dimension_numbers = #tpu.dot_dimension_numbers<[1], [0], [0], [1], [0, 0, 1, 1], [], []>} : vector<16x32xbf16>, vector<32x128xbf16>, vector<16x128xf32> -> vector<16x128xf32>
    %12 = math.exp %11 : vector<16x128xf32>
    %cst_5 = arith.constant dense<0.000000e+00> : vector<16xf32>
    %13 = vector.multi_reduction <add>, %12, %cst_5 [1] : vector<16x128xf32> to vector<16xf32>
    %14 = vector.shape_cast %13 : vector<16xf32> to vector<16x1xf32>
    %cst_6 = arith.constant 2.500000e-03 : f32
    %15 = vector.broadcast %cst_6 : f32 to vector<16x1xf32>
    %16 = arith.mulf %15, %14 : vector<16x1xf32>
    %17 = vector.broadcast %16 : vector<16x1xf32> to vector<16x128xf32>
    %18 = arith.subf %12, %17 : vector<16x128xf32>
    %19 = math.absf %18 : vector<16x128xf32>
    %cst_7 = arith.constant 9.99999996E-13 : f32
    %20 = vector.broadcast %cst_7 : f32 to vector<16x128xf32>
    %21 = arith.addf %19, %20 : vector<16x128xf32>
    %cst_8 = arith.constant 0.000000e+00 : f32
    %22 = vector.broadcast %cst_8 : f32 to vector<16x128xf32>
    %23 = arith.maximumf %18, %22 : vector<16x128xf32>
    %24 = arith.mulf %23, %12 : vector<16x128xf32>
    %25 = tpu.reciprocal %21 {approx = true} : vector<16x128xf32> -> vector<16x128xf32>
    %26 = arith.mulf %21, %25 : vector<16x128xf32>
    %cst_9 = arith.constant 2.000000e+00 : f32
    %27 = vector.broadcast %cst_9 : f32 to vector<16x128xf32>
    %28 = arith.subf %27, %26 : vector<16x128xf32>
    %29 = arith.mulf %25, %28 : vector<16x128xf32>
    %30 = arith.mulf %24, %29 : vector<16x128xf32>
    %cst_10 = arith.constant dense<0.000000e+00> : vector<16xf32>
    %31 = vector.multi_reduction <add>, %30, %cst_10 [1] : vector<16x128xf32> to vector<16xf32>
    %32 = vector.shape_cast %31 : vector<16xf32> to vector<16x1xf32>
    %cst_11 = arith.constant 9.99999996E-13 : f32
    %33 = vector.broadcast %cst_11 : f32 to vector<16x1xf32>
    %34 = arith.maximumf %32, %33 : vector<16x1xf32>
    %35 = tpu.reciprocal %34 {approx = true} : vector<16x1xf32> -> vector<16x1xf32>
    %36 = arith.mulf %34, %35 : vector<16x1xf32>
    %cst_12 = arith.constant 2.000000e+00 : f32
    %37 = vector.broadcast %cst_12 : f32 to vector<16x1xf32>
    %38 = arith.subf %37, %36 : vector<16x1xf32>
    %39 = arith.mulf %35, %38 : vector<16x1xf32>
    %40 = vector.broadcast %39 : vector<16x1xf32> to vector<16x128xf32>
    %41 = arith.mulf %30, %40 : vector<16x128xf32>
    %42 = arith.truncf %41 : vector<16x128xf32> to vector<16x128xbf16>
    %c0_13 = arith.constant 0 : index
    %c0_14 = arith.constant 0 : index
    %43 = vector.load %arg2[%c0_13, %c0_14] : memref<128x32xbf16, #tpu.memory_space<vmem>>, vector<128x32xbf16>
    %cst_15 = arith.constant dense<0.000000e+00> : vector<16x32xf32>
    %44 = tpu.matmul %42, %43, %cst_15 {dimension_numbers = #tpu.dot_dimension_numbers<[1], [0], [0], [1], [0, 0, 1, 1], [], []>} : vector<16x128xbf16>, vector<128x32xbf16>, vector<16x32xf32> -> vector<16x32xf32>
    %c0_16 = arith.constant 0 : index
    %c0_17 = arith.constant 0 : index
    %45 = vector.load %arg4[%c0_16, %c0_17] : memref<16x32xf32, #tpu.memory_space<vmem>>, vector<16x32xf32>
    tpu.vector_store %arg4[%c0_16, %c0_17], %44 {strides = array<i32>} : memref<16x32xf32, #tpu.memory_space<vmem>>, vector<16x32xf32>,
    %c0_18 = arith.constant 0 : index
    %c0_19 = arith.constant 0 : index
    %46 = vector.load %arg5[%c0_18, %c0_19] : memref<16x128xf32, #tpu.memory_space<vmem>>, vector<16x128xf32>
    tpu.vector_store %arg5[%c0_18, %c0_19], %41 {strides = array<i32>} : memref<16x128xf32, #tpu.memory_space<vmem>>, vector<16x128xf32>,
    return
  }
  func.func @transform_0(%arg0: i32) -> (i32, i32) {
    %c0_i32 = arith.constant 0 : i32
    %c0_i32_0 = arith.constant 0 : i32
    return %arg0, %c0_i32 : i32, i32
  }
  func.func @transform_1(%arg0: i32) -> (i32, i32) {
    %c0_i32 = arith.constant 0 : i32
    %c0_i32_0 = arith.constant 0 : i32
    %c0_i32_1 = arith.constant 0 : i32
    return %c0_i32, %c0_i32_0 : i32, i32
  }
  func.func @transform_2(%arg0: i32) -> (i32, i32) {
    %c0_i32 = arith.constant 0 : i32
    %c0_i32_0 = arith.constant 0 : i32
    %c0_i32_1 = arith.constant 0 : i32
    return %c0_i32, %c0_i32_0 : i32, i32
  }
  func.func @transform_3(%arg0: i32) -> (i32, i32) {
    %c0_i32 = arith.constant 0 : i32
    %c0_i32_0 = arith.constant 0 : i32
    return %arg0, %c0_i32 : i32, i32
  }
  func.func @transform_4(%arg0: i32) -> (i32, i32) {
    %c0_i32 = arith.constant 0 : i32
    %c0_i32_0 = arith.constant 0 : i32
    return %arg0, %c0_i32 : i32, i32
  }
}

</mosaic_0001>

<llo_original>
// kernel: tpu_custom_call.1
$region0: #{tpu_custom_call.1}
  #allocation0 [shape = 'u32[]', space=smem, size = 0x4, offset = 0x4, fixed_abs, tag = 'smem constant byte address 0x4 - core index']
  #allocation1 [shape = 'u32[144,128]{1,0:T(1,128)}', space=vmem, size = 0x12000, scoped, tag = 'internal scratch']
  %s0 = inlined_call_operand.vmem [shape: f32[20,32], index: 0, kind: input, shape index: {}]
  %s1 = inlined_call_operand.vmem [shape: bf16[128,32], index: 1, kind: input, shape index: {}]
  %s2 = inlined_call_operand.vmem [shape: bf16[32,128], index: 2, kind: input, shape index: {}]
  %s3 = inlined_call_operand.hbm [shape: f32[20,32], index: 3, kind: output, shape index: {0}]
  %s4 = inlined_call_operand.hbm [shape: f32[20,128], index: 4, kind: output, shape index: {1}]
  %5 = xla_tuple %s3, %s4
  %s6 = sld [smem:[#allocation0]]
  $region53: #{tpu_custom_call.1} parent=0
    _
  %s8 = ssub.s32 1, %s6
  %s9 = scalar_select 0, %s8, %s6
  $region1: #{tpu_custom_call.1} parent=0
    #allocation2 [shape = 'u8[16384]{0}', space=vmem, size = 0x4000, scoped, tag = 'output window, operand 0']
    #allocation3 [shape = 's32[2]{0}', space=sflag, size = 0x8, scoped, tag = 'scoped memory for tpu_custom_call.1']
    #allocation4 [shape = 'u8[16384]{0}', space=vmem, size = 0x4000, scoped, tag = 'output window, operand 1']
    #allocation5 [shape = 's32[2]{0}', space=sflag, size = 0x8, scoped, tag = 'scoped memory for tpu_custom_call.1']
    %10 = vsyncpa [#allocation3], 0
    %s11 = scalar_lea.sflag [#allocation3], 1
    %12 = vsyncpa %s11, 0
    %13 = vsyncpa [#allocation5], 0
    %s14 = scalar_lea.sflag [#allocation5], 1
    %15 = vsyncpa %s14, 0
    loop: start=0, step=1, limit=4
    $region2: #{tpu_custom_call.1} parent=1 // loop_pre_header
      _
    $region3: #{tpu_custom_call.1} parent=1 // loop_header
      %s17 = sphi 0, %s21
      %p18 = scmp.ge.s32.totalorder %s17, 4
      %s27 = sphi 0, %s29
      %s30 = sphi 0, %s27
      %s31 = sphi 0, %s30
      %s47 = sphi 0, %s31
      %s51 = sphi 0, %s51
      %s53 = sphi 0, %s51
      %s54 = sphi 0, %s53
      %s68 = sphi 0, %s54
      %s72 = sphi 0, %s72
      %s74 = sphi 0, %s72
      %s75 = sphi 0, %s74
      %s89 = sphi 0, %s75
      %s95 = sphi 0, %s97
      %s98 = sphi 0, %s95
      %s99 = sphi 0, %s98
      %s115 = sphi 0, %s99
      %s121 = sphi 0, %s123
      %s124 = sphi 0, %s121
      %s125 = sphi 0, %s124
      %s141 = sphi 0, %s125
    $region4: #{tpu_custom_call.1} parent=1 // loop_header_branch
      %20 = sbr.rel (%p18) target = $region8
    $region5: #{tpu_custom_call.1} parent=1 // loop_body
      %s22 = ssub.s32 %s17, 1
      %s23 = ssub.s32 %s17, 2
      %s24 = sadd.s32 %s17, 1
      %s25 = ssub.s32 %s17, %s24
      %p26 = scmp.eq.s32.totalorder %s25, 0
      %s28 = sadd.s32 %s27, 1
      %s29 = scalar_select %p26, %s27, %s28
      %p32 = pneg %p26
      %p33 = scmp.eq.s32.totalorder %s17, 1
      %p34 = por %p32, %p33
      %p35 = scmp.ne.s32.totalorder %s27, %s30
      %p36 = scmp.eq.s32.totalorder %s17, 0
      %p37 = por %p35, %p36
      %p38 = scmp.ne.s32.totalorder %s27, %s30
      %p39 = scmp.eq.s32.totalorder %s22, 1
      %p40 = por %p38, %p39
      %p41 = scmp.ne.s32.totalorder %s30, %s31
      %p42 = scmp.eq.s32.totalorder %s22, 0
      %p43 = por %p41, %p42
      %p44 = scmp.ne.s32.totalorder %s30, %s31
      %p45 = scmp.eq.s32.totalorder %s23, 1
      %p46 = por %p44, %p45
      %p48 = scmp.ne.s32.totalorder %s31, %s47
      %p49 = scmp.eq.s32.totalorder %s23, 0
      %p50 = por %p48, %p49
      %s52 = sadd.s32 %s51, 1
      %p55 = scmp.eq.s32.totalorder %s17, 1
      %p56 = scmp.ne.s32.totalorder %s51, %s53
      %p57 = scmp.eq.s32.totalorder %s17, 0
      %p58 = por %p56, %p57
      %p59 = scmp.ne.s32.totalorder %s51, %s53
      %p60 = scmp.eq.s32.totalorder %s22, 1
      %p61 = por %p59, %p60
      %p62 = scmp.ne.s32.totalorder %s53, %s54
      %p63 = scmp.eq.s32.totalorder %s22, 0
      %p64 = por %p62, %p63
      %p65 = scmp.ne.s32.totalorder %s53, %s54
      %p66 = scmp.eq.s32.totalorder %s23, 1
      %p67 = por %p65, %p66
      %p69 = scmp.ne.s32.totalorder %s54, %s68
      %p70 = scmp.eq.s32.totalorder %s23, 0
      %p71 = por %p69, %p70
      %s73 = sadd.s32 %s72, 1
      %p76 = scmp.eq.s32.totalorder %s17, 1
      %p77 = scmp.ne.s32.totalorder %s72, %s74
      %p78 = scmp.eq.s32.totalorder %s17, 0
      %p79 = por %p77, %p78
      %p80 = scmp.ne.s32.totalorder %s72, %s74
      %p81 = scmp.eq.s32.totalorder %s22, 1
      %p82 = por %p80, %p81
      %p83 = scmp.ne.s32.totalorder %s74, %s75
      %p84 = scmp.eq.s32.totalorder %s22, 0
      %p85 = por %p83, %p84
      %p86 = scmp.ne.s32.totalorder %s74, %s75
      %p87 = scmp.eq.s32.totalorder %s23, 1
      %p88 = por %p86, %p87
      %p90 = scmp.ne.s32.totalorder %s75, %s89
      %p91 = scmp.eq.s32.totalorder %s23, 0
      %p92 = por %p90, %p91
      %s93 = ssub.s32 %s17, %s24
      %p94 = scmp.eq.s32.totalorder %s93, 0
      %s96 = sadd.s32 %s95, 1
      %s97 = scalar_select %p94, %s95, %s96
      %p100 = pneg %p94
      %p101 = scmp.eq.s32.totalorder %s17, 1
      %p102 = por %p100, %p101
      %p103 = scmp.ne.s32.totalorder %s95, %s98
      %p104 = scmp.eq.s32.totalorder %s17, 0
      %p105 = por %p103, %p104
      %p106 = scmp.ne.s32.totalorder %s95, %s98
      %p107 = scmp.eq.s32.totalorder %s22, 1
      %p108 = por %p106, %p107
      %p109 = scmp.ne.s32.totalorder %s98, %s99
      %p110 = scmp.eq.s32.totalorder %s22, 0
      %p111 = por %p109, %p110
      %p112 = scmp.ne.s32.totalorder %s98, %s99
      %p113 = scmp.eq.s32.totalorder %s23, 1
      %p114 = por %p112, %p113
      %p116 = scmp.ne.s32.totalorder %s99, %s115
      %p117 = scmp.eq.s32.totalorder %s23, 0
      %p118 = por %p116, %p117
      %s119 = ssub.s32 %s17, %s24
      %p120 = scmp.eq.s32.totalorder %s119, 0
      %s122 = sadd.s32 %s121, 1
      %s123 = scalar_select %p120, %s121, %s122
      %p126 = pneg %p120
      %p127 = scmp.eq.s32.totalorder %s17, 1
      %p128 = por %p126, %p127
      %p129 = scmp.ne.s32.totalorder %s121, %s124
      %p130 = scmp.eq.s32.totalorder %s17, 0
      %p131 = por %p129, %p130
      %p132 = scmp.ne.s32.totalorder %s121, %s124
      %p133 = scmp.eq.s32.totalorder %s22, 1
      %p134 = por %p132, %p133
      %p135 = scmp.ne.s32.totalorder %s124, %s125
      %p136 = scmp.eq.s32.totalorder %s22, 0
      %p137 = por %p135, %p136
      %p138 = scmp.ne.s32.totalorder %s124, %s125
      %p139 = scmp.eq.s32.totalorder %s23, 1
      %p140 = por %p138, %p139
      %p142 = scmp.ne.s32.totalorder %s125, %s141
      %p143 = scmp.eq.s32.totalorder %s23, 0
      %p144 = por %p142, %p143
      %p145 = scmp.le.s32.totalorder 1, %s17
      %p146 = scmp.lt.s32.totalorder %s17, 3
      %p147 = pnand %p145, %p146
      %p148 = pneg %p147
      // Predicated region
      $region9: #{tpu_custom_call.1} parent=5 // pred_check
        _
      $region10: #{tpu_custom_call.1} parent=5 // pred_check_branch
        %150 = sbr.rel (%p147) target = $region12
      $region11: #{tpu_custom_call.1} parent=5 // pred_region
        %s151 = ssub.s32 %s17, 1
        // Predicated region
        $region13: #{tpu_custom_call.1} parent=11 // pred_check
          %p152 = pneg %p64
        $region14: #{tpu_custom_call.1} parent=11 // pred_check_branch
          %154 = sbr.rel (%p152) target = $region16
        $region15: #{tpu_custom_call.1} parent=11 // pred_region
          _
        $region16: #{tpu_custom_call.1} parent=11 // pred_fallthru
          _
        // Predicated region
        $region17: #{tpu_custom_call.1} parent=11 // pred_check
          %p155 = pneg %p85
        $region18: #{tpu_custom_call.1} parent=11 // pred_check_branch
          %157 = sbr.rel (%p155) target = $region20
        $region19: #{tpu_custom_call.1} parent=11 // pred_region
          _
        $region20: #{tpu_custom_call.1} parent=11 // pred_fallthru
          _
      $region12: #{tpu_custom_call.1} parent=5 // pred_fallthru
        _
      %p158 = scmp.lt.s32.totalorder %s17, 2
      // Predicated region
      $region21: #{tpu_custom_call.1} parent=5 // pred_check
        %p159 = pneg %p158
      $region22: #{tpu_custom_call.1} parent=5 // pred_check_branch
        %161 = sbr.rel (%p159) target = $region24
      $region23: #{tpu_custom_call.1} parent=5 // pred_region
        // Predicated region
        $region25: #{tpu_custom_call.1} parent=23 // pred_check
          %p162 = pneg %p37
        $region26: #{tpu_custom_call.1} parent=23 // pred_check_branch
          %164 = sbr.rel (%p162) target = $region28
        $region27: #{tpu_custom_call.1} parent=23 // pred_region
          %s165 = smul.u32 2, %s17
          %s166 = ssub.s32 3, %s165
          %p167 = scmp.lt.s32.totalorder %s166, 2
          %s168 = scalar_select %p167, %s166, 2
          %s169 = smul.u32 128, %s168
          %p170 = scmp.lt.s32.totalorder %s165, 2
          %s171 = scalar_select %p170, %s165, 2
          %s172 = smul.addr %s171, 8
          %s173 = scalar_lea.vmem %s0, %s172
          %s174 = smul.u32 2, %s17
          %s175 = ssub.s32 3, %s174
          %p176 = scmp.lt.s32.totalorder %s175, 2
          %s177 = scalar_select %p176, %s175, 2
          %s178 = smul.u32 128, %s177
        $region28: #{tpu_custom_call.1} parent=23 // pred_fallthru
          _
      $region24: #{tpu_custom_call.1} parent=5 // pred_fallthru
        _
      %p179 = scmp.le.s32.totalorder 1, %s17
      %p180 = scmp.lt.s32.totalorder %s17, 3
      %p181 = pnand %p179, %p180
      %p182 = pneg %p181
      // Predicated region
      $region29: #{tpu_custom_call.1} parent=5 // pred_check
        _
      $region30: #{tpu_custom_call.1} parent=5 // pred_check_branch
        %184 = sbr.rel (%p181) target = $region32
      $region31: #{tpu_custom_call.1} parent=5 // pred_region
        %s185 = ssub.s32 %s17, 1
        %s186 = smul.u32 2, %s22
        %s187 = ssub.s32 3, %s186
        %p188 = scmp.lt.s32.totalorder %s187, 2
        %s189 = scalar_select %p188, %s187, 2
        %s190 = smul.u32 128, %s189
        %p191 = scmp.lt.s32.totalorder %s186, 2
        %s192 = scalar_select %p191, %s186, 2
        %s193 = smul.addr %s192, 8
        %s194 = scalar_lea.vmem %s0, %s193
        %p195 = pneg %p43
        %p196 = pneg %p40
        %p197 = pneg %p64
        %p198 = pneg %p61
        %p199 = pneg %p85
        %p200 = pneg %p82
        %p201 = pneg %p111
        %p202 = pneg %p108
        %s203 = sand.u32 %s98, 1
        %s204 = scalar_lea.sflag [#allocation3], %s203
        %s205 = sand.u32 %s98, 1
        %s206 = smul.addr %s205, 16
        %s207 = scalar_lea.vmem [#allocation2], %s206
        %p208 = pneg %p137
        %p209 = pneg %p134
        %s210 = sand.u32 %s124, 1
        %s211 = scalar_lea.sflag [#allocation5], %s210
        %s212 = sand.u32 %s124, 1
        %s213 = smul.addr %s212, 16
        %s214 = scalar_lea.vmem [#allocation4], %s213
        %s215 = smul.u32 2, %s22
        %s216 = ssub.s32 3, %s215
        %p217 = scmp.lt.s32.totalorder %s216, 2
        %s218 = scalar_select %p217, %s216, 2
        %s219 = smul.u32 128, %s218
        %p220 = scmp.lt.s32.totalorder %s215, 2
        %s221 = scalar_select %p220, %s215, 2
        %s222 = smul.addr %s221, 8
        %s223 = scalar_lea.vmem %s0, %s222
        %s224 = smul.u32 2, %s22
        %s225 = ssub.s32 3, %s224
        %p226 = scmp.lt.s32.totalorder %s225, 2
        %s227 = scalar_select %p226, %s225, 2
        %s228 = smul.u32 128, %s227
        %s229 = smul.u32 2, %s22
        %s230 = ssub.s32 3, %s229
        %p231 = scmp.lt.s32.totalorder %s230, 2
        %s232 = scalar_select %p231, %s230, 2
        %s233 = smul.u32 128, %s232
        %s234 = smul.u32 2, %s22
        %s235 = ssub.s32 3, %s234
        %p236 = scmp.lt.s32.totalorder %s235, 2
        %s237 = scalar_select %p236, %s235, 2
        %s238 = smul.u32 128, %s237
        %v240 = vld [vmem:[%s223] sm:$0xff]
        %v241 = vld [vmem:[%s223 + $0x8] sm:$0xff]
        %v242 = vmul.f32 %v240, %v240
        %v243 = vmul.f32 %v241, %v241
        %vm244 = vcmask 261120
        %v245 = vsel %vm244, %v242, 0.0
        %246 = vadd.xlane.f32.xlu0 %v245
        %v247 = vpop.xlane.xlu0 %246
        %v248 = vsel %vm244, %v243, 0.0
        %249 = vadd.xlane.f32.xlu0 %v248
        %v250 = vpop.xlane.xlu0 %249
        %v251 = vmax.f32 %v247, 1e-24
        %v252 = vmax.f32 %v250, 1e-24
        %v253 = vrsqrt.pop %v251
        %v254 = vrsqrt.pop %v252
        %v255 = vmul.f32 %v240, %v253
        %v256 = vmul.f32 %v241, %v254
        %v257 = vpack.c.bf16 %v256, %v255
        %v258 = vld [vmem:[%s2] sm:$0xf]
        %v259 = vld [vmem:[%s2 + $0x4] sm:$0xf]
        %v260 = vld [vmem:[%s2 + $0x8] sm:$0xf]
        %v261 = vld [vmem:[%s2 + $0xc] sm:$0xf]
        %v266 = vunpack.c.l.b16 %v258
        %v267 = vunpack.c.l.b16 %v259
        %v268 = vunpack.c.l.b16 %v260
        %v269 = vunpack.c.l.b16 %v261
        %v270 = vpack.c.b16 %v267, %v266
        %v271 = vpack.c.b16 %v269, %v268
        %v275 = vsel %vm244, %v257, 0
        %277 = vmatprep.subr.bf16.mxu0 0
        %278 = vmatpush1.bf16.msra.mxu0 %v270
        %279 = vmatprep.subr.bf16.mxu0 0
        %280 = vmatpush1.bf16.msra.mxu0 %v271
        %281 = vmatprep.subr.bf16.mxu0 0
        %282 = vmatpush1.bf16.msra.mxu0 0
        %283 = vmatprep.subr.bf16.mxu0 0
        %284 = vmatpush1.bf16.msra.mxu0 0
        %285 = vmatprep.subr.bf16.mxu0 0
        %286 = vmatpush1.bf16.msra.mxu0 0
        %287 = vmatprep.subr.bf16.mxu0 0
        %288 = vmatpush1.bf16.msra.mxu0 0
        %289 = vmatprep.subr.bf16.mxu0 0
        %290 = vmatpush1.bf16.msra.mxu0 0
        %291 = vmatprep.subr.bf16.mxu0 0
        %292 = vmatpush1.bf16.msra.mxu0 0
        %293 = vmatprep.subr.bf16.mxu0 0
        %294 = vmatpush1.bf16.msra.mxu0 0
        %295 = vmatprep.subr.bf16.mxu0 0
        %296 = vmatpush1.bf16.msra.mxu0 0
        %297 = vmatprep.subr.bf16.mxu0 0
        %298 = vmatpush1.bf16.msra.mxu0 0
        %299 = vmatprep.subr.bf16.mxu0 0
        %300 = vmatpush1.bf16.msra.mxu0 0
        %301 = vmatprep.subr.bf16.mxu0 0
        %302 = vmatpush1.bf16.msra.mxu0 0
        %303 = vmatprep.subr.bf16.mxu0 0
        %304 = vmatpush1.bf16.msra.mxu0 0
        %305 = vmatprep.subr.bf16.mxu0 0
        %306 = vmatpush1.bf16.msra.mxu0 0
        %307 = vmatprep.subr.bf16.mxu0 0
        %308 = vmatpush1.bf16.msra.mxu0 0
        %309 = vmatprep.mubr.bf16.mxu0 0
        %310 = vmatmul.mubr.bf16.gmra.mrb[0].mxu0 %v275
        %v311 = vpop.f32.mrb[0].mxu0
        %v312 = vadd.f32 0.0, %v311
        %v313 = vpop.f32.mrb[0].mxu0
        %v314 = vpop.f32.mrb[0].mxu0
        %v315 = vadd.f32 0.0, %v314
        %v316 = vpop.f32.mrb[0].mxu0
        %317 = vdwg.mxu0
        %v318 = vmul.f32 %v312, 1.442695
        %v319 = vpow.pop %v318
        %v320 = vmul.f32 %v315, 1.442695
        %v321 = vpow.pop %v320
        %322 = vadd.xlane.f32.xlu0 %v319
        %v323 = vpop.xlane.xlu0 %322
        %324 = vadd.xlane.f32.xlu0 %v321
        %v325 = vpop.xlane.xlu0 %324
        %v326 = vmul.f32 %v323, 0.0025
        %v327 = vmul.f32 %v325, 0.0025
        %v328 = vsub.f32 %v319, %v326
        %v329 = vsub.f32 %v321, %v327
        %v330 = vand.u32 2147483647, %v328
        %v331 = vand.u32 2147483647, %v329
        %v332 = vadd.f32 %v330, 1e-12
        %v333 = vadd.f32 %v331, 1e-12
        %v334 = vmax.f32 %v328, 0.0
        %v335 = vmax.f32 %v329, 0.0
        %v336 = vmul.f32 %v334, %v319
        %v337 = vmul.f32 %v335, %v321
        %v338 = vrcp.pop %v332
        %v339 = vrcp.pop %v333
        %v340 = vmul.f32 %v332, %v338
        %v341 = vmul.f32 %v333, %v339
        %v342 = vsub.f32 2.0, %v340
        %v343 = vsub.f32 2.0, %v341
        %v344 = vmul.f32 %v338, %v342
        %v345 = vmul.f32 %v339, %v343
        %v346 = vmul.f32 %v336, %v344
        %v347 = vmul.f32 %v337, %v345
        %348 = vadd.xlane.f32.xlu0 %v346
        %v349 = vpop.xlane.xlu0 %348
        %350 = vadd.xlane.f32.xlu0 %v347
        %v351 = vpop.xlane.xlu0 %350
        %v352 = vmax.f32 %v349, 1e-12
        %v353 = vmax.f32 %v351, 1e-12
        %v354 = vrcp.pop %v352
        %v355 = vrcp.pop %v353
        %v356 = vmul.f32 %v352, %v354
        %v357 = vmul.f32 %v353, %v355
        %v358 = vsub.f32 2.0, %v356
        %v359 = vsub.f32 2.0, %v357
        %v360 = vmul.f32 %v354, %v358
        %v361 = vmul.f32 %v355, %v359
        %v362 = vmul.f32 %v346, %v360
        %v363 = vmul.f32 %v347, %v361
        %v364 = vpack.c.bf16 %v363, %v362
        %v365 = vld [vmem:[%s1] sm:$0xf]
        %v366 = vld [vmem:[%s1 + $0x4] sm:$0xf]
        %v367 = vld [vmem:[%s1 + $0x8] sm:$0xf]
        %v368 = vld [vmem:[%s1 + $0xc] sm:$0xf]
        %v369 = vld [vmem:[%s1 + $0x10] sm:$0xf]
        %v370 = vld [vmem:[%s1 + $0x14] sm:$0xf]
        %v371 = vld [vmem:[%s1 + $0x18] sm:$0xf]
        %v372 = vld [vmem:[%s1 + $0x1c] sm:$0xf]
        %v373 = vld [vmem:[%s1 + $0x20] sm:$0xf]
        %v374 = vld [vmem:[%s1 + $0x24] sm:$0xf]
        %v375 = vld [vmem:[%s1 + $0x28] sm:$0xf]
        %v376 = vld [vmem:[%s1 + $0x2c] sm:$0xf]
        %v377 = vld [vmem:[%s1 + $0x30] sm:$0xf]
        %v378 = vld [vmem:[%s1 + $0x34] sm:$0xf]
        %v379 = vld [vmem:[%s1 + $0x38] sm:$0xf]
        %v380 = vld [vmem:[%s1 + $0x3c] sm:$0xf]
        %v397 = vunpack.c.l.b16 %v365
        %v398 = vunpack.c.l.b16 %v366
        %v399 = vunpack.c.l.b16 %v367
        %v400 = vunpack.c.l.b16 %v368
        %v401 = vunpack.c.l.b16 %v369
        %v402 = vunpack.c.l.b16 %v370
        %v403 = vunpack.c.l.b16 %v371
        %v404 = vunpack.c.l.b16 %v372
        %v405 = vunpack.c.l.b16 %v373
        %v406 = vunpack.c.l.b16 %v374
        %v407 = vunpack.c.l.b16 %v375
        %v408 = vunpack.c.l.b16 %v376
        %v409 = vunpack.c.l.b16 %v377
        %v410 = vunpack.c.l.b16 %v378
        %v411 = vunpack.c.l.b16 %v379
        %v412 = vunpack.c.l.b16 %v380
        %v413 = vpack.c.b16 %v398, %v397
        %v414 = vpack.c.b16 %v400, %v399
        %v415 = vpack.c.b16 %v402, %v401
        %v416 = vpack.c.b16 %v404, %v403
        %v417 = vpack.c.b16 %v406, %v405
        %v418 = vpack.c.b16 %v408, %v407
        %v419 = vpack.c.b16 %v410, %v409
        %v420 = vpack.c.b16 %v412, %v411
        %429 = vmatprep.subr.bf16.mxu0 0
        %430 = vmatpush1.bf16.msra.mxu0 %v413
        %431 = vmatprep.subr.bf16.mxu0 0
        %432 = vmatpush1.bf16.msra.mxu0 %v414
        %433 = vmatprep.subr.bf16.mxu0 0
        %434 = vmatpush1.bf16.msra.mxu0 %v415
        %435 = vmatprep.subr.bf16.mxu0 0
        %436 = vmatpush1.bf16.msra.mxu0 %v416
        %437 = vmatprep.subr.bf16.mxu0 0
        %438 = vmatpush1.bf16.msra.mxu0 %v417
        %439 = vmatprep.subr.bf16.mxu0 0
        %440 = vmatpush1.bf16.msra.mxu0 %v418
        %441 = vmatprep.subr.bf16.mxu0 0
        %442 = vmatpush1.bf16.msra.mxu0 %v419
        %443 = vmatprep.subr.bf16.mxu0 0
        %444 = vmatpush1.bf16.msra.mxu0 %v420
        %445 = vmatprep.subr.bf16.mxu0 0
        %446 = vmatpush1.bf16.msra.mxu0 0
        %447 = vmatprep.subr.bf16.mxu0 0
        %448 = vmatpush1.bf16.msra.mxu0 0
        %449 = vmatprep.subr.bf16.mxu0 0
        %450 = vmatpush1.bf16.msra.mxu0 0
        %451 = vmatprep.subr.bf16.mxu0 0
        %452 = vmatpush1.bf16.msra.mxu0 0
        %453 = vmatprep.subr.bf16.mxu0 0
        %454 = vmatpush1.bf16.msra.mxu0 0
        %455 = vmatprep.subr.bf16.mxu0 0
        %456 = vmatpush1.bf16.msra.mxu0 0
        %457 = vmatprep.subr.bf16.mxu0 0
        %458 = vmatpush1.bf16.msra.mxu0 0
        %459 = vmatprep.subr.bf16.mxu0 0
        %460 = vmatpush1.bf16.msra.mxu0 0
        %461 = vmatprep.mubr.bf16.mxu0 0
        %462 = vmatmul.mubr.bf16.gmra.mrb[0].mxu0 %v364
        %v463 = vpop.f32.mrb[0].mxu0
        %v464 = vadd.f32 0.0, %v463
        %v465 = vpop.f32.mrb[0].mxu0
        %v466 = vpop.f32.mrb[0].mxu0
        %v467 = vadd.f32 0.0, %v466
        %v468 = vpop.f32.mrb[0].mxu0
        %469 = vdwg.mxu0
        %470 = vst.msk [vmem:[%s207] sm:$0xff] %vm244, %v464
        %471 = vst.msk [vmem:[%s207 + $0x8] sm:$0xff] %vm244, %v467
        %472 = vst [vmem:[%s214] sm:$0xff] %v362
        %473 = vst [vmem:[%s214 + $0x8] sm:$0xff] %v363
        %s474 = sand.u32 %s98, 1
        %s475 = scalar_lea.sflag [#allocation3], %s474
        %s476 = sand.u32 %s98, 1
        %s477 = smul.addr %s476, 16
        %s478 = scalar_lea.vmem [#allocation2], %s477
        %s479 = sand.u32 %s124, 1
        %s480 = scalar_lea.sflag [#allocation5], %s479
        %s481 = sand.u32 %s124, 1
        %s482 = smul.addr %s481, 16
        %s483 = scalar_lea.vmem [#allocation4], %s482
        // Predicated region
        $region33: #{tpu_custom_call.1} parent=31 // pred_check
          %p484 = pneg %p108
        $region34: #{tpu_custom_call.1} parent=31 // pred_check_branch
          %486 = sbr.rel (%p484) target = $region36
        $region35: #{tpu_custom_call.1} parent=31 // pred_region
          %s487 = smul.u32 2, %s22
          %s488 = ssub.s32 3, %s487
          %p489 = scmp.lt.s32.totalorder %s488, 2
          %s490 = scalar_select %p489, %s488, 2
          %s491 = smul.u32 128, %s490
          %s493 = ssub.s32 256, %s491
          %494 = vsyncadd %s475, %s493
          %p495 = scmp.ne.s32.totalorder 0, %s491
          %s496 = smul.addr %s487, 128
          %s497 = scalar_lea.hbm %s3, %s496
          %s498 = smul.u32 8, %s490
          %s499 = sshll.u32 %s478, 4
          %s500 = int_to_ptr.vmem [resolvable:$true] %s499
          %s501 = sshll.u32 %s498, 4
          %505 = dma.vmem_to_hbm [thread:$0]  (%p495), %s500, %s501, %s497, %s475, 128, 128, 8
        $region36: #{tpu_custom_call.1} parent=31 // pred_fallthru
          _
        // Predicated region
        $region37: #{tpu_custom_call.1} parent=31 // pred_check
          %p506 = pneg %p134
        $region38: #{tpu_custom_call.1} parent=31 // pred_check_branch
          %508 = sbr.rel (%p506) target = $region40
        $region39: #{tpu_custom_call.1} parent=31 // pred_region
          %s509 = smul.u32 2, %s22
          %s510 = ssub.s32 3, %s509
          %p511 = scmp.lt.s32.totalorder %s510, 2
          %s512 = scalar_select %p511, %s510, 2
          %s513 = smul.u32 128, %s512
          %s515 = ssub.s32 256, %s513
          %516 = vsyncadd %s480, %s515
          %p517 = scmp.ne.s32.totalorder 0, %s513
          %s518 = smul.addr %s509, 128
          %s519 = scalar_lea.hbm %s4, %s518
          %s520 = smul.u32 8, %s512
          %s521 = sshll.u32 %s483, 4
          %s522 = int_to_ptr.vmem [resolvable:$true] %s521
          %s523 = sshll.u32 %s520, 4
          %527 = dma.vmem_to_hbm [thread:$0]  (%p517), %s522, %s523, %s519, %s480, 128, 128, 8
        $region40: #{tpu_custom_call.1} parent=31 // pred_fallthru
          _
      $region32: #{tpu_custom_call.1} parent=5 // pred_fallthru
        _
      %p528 = scmp.le.s32.totalorder 2, %s17
      // Predicated region
      $region41: #{tpu_custom_call.1} parent=5 // pred_check
        %p529 = pneg %p528
      $region42: #{tpu_custom_call.1} parent=5 // pred_check_branch
        %531 = sbr.rel (%p529) target = $region44
      $region43: #{tpu_custom_call.1} parent=5 // pred_region
        %s532 = ssub.s32 %s17, 2
        // Predicated region
        $region45: #{tpu_custom_call.1} parent=43 // pred_check
          %p533 = pneg %p114
        $region46: #{tpu_custom_call.1} parent=43 // pred_check_branch
          %535 = sbr.rel (%p533) target = $region48
        $region47: #{tpu_custom_call.1} parent=43 // pred_region
          %s536 = sand.u32 %s99, 1
          %s537 = scalar_lea.sflag [#allocation3], %s536
          %s538 = sand.u32 %s99, 1
          %s539 = smul.addr %s538, 16
          %s540 = scalar_lea.vmem [#allocation2], %s539
          %541 = dma.done %s537, 256
        $region48: #{tpu_custom_call.1} parent=43 // pred_fallthru
          _
        // Predicated region
        $region49: #{tpu_custom_call.1} parent=43 // pred_check
          %p542 = pneg %p140
        $region50: #{tpu_custom_call.1} parent=43 // pred_check_branch
          %544 = sbr.rel (%p542) target = $region52
        $region51: #{tpu_custom_call.1} parent=43 // pred_region
          %s545 = sand.u32 %s125, 1
          %s546 = scalar_lea.sflag [#allocation5], %s545
          %s547 = sand.u32 %s125, 1
          %s548 = smul.addr %s547, 16
          %s549 = scalar_lea.vmem [#allocation4], %s548
          %550 = dma.done %s546, 256
        $region52: #{tpu_custom_call.1} parent=43 // pred_fallthru
          _
      $region44: #{tpu_custom_call.1} parent=5 // pred_fallthru
        _
    $region6: #{tpu_custom_call.1} parent=1 // loop_footer
      %s21 = sadd.s32 1, %s17
    $region7: #{tpu_custom_call.1} parent=1 // loop_footer_branch
      %16 = sbr.rel target = $region3
    $region8: #{tpu_custom_call.1} parent=1 // loop_exit
      _
    %551 = vsyncpa [#allocation3], 1
    %s552 = scalar_lea.sflag [#allocation3], 1
    %553 = vsyncpa %s552, 1
    %554 = vsyncpa [#allocation5], 1
    %s555 = scalar_lea.sflag [#allocation5], 1
    %556 = vsyncpa %s555, 1

</llo_original>
